<compile_context>
chip_gen: v7x
topology: tpu7x:2x2x1
jax: 0.10.0
libtpu: 0.0.40
codegen_flags: <defaults>
</compile_context>

<pallas_src>
import jax
import jax.numpy as jnp
from jax.experimental import pallas as pl
from jax.experimental.pallas import tpu as pltpu


# ---------------------------------------------------------------------------
# helpers
# ---------------------------------------------------------------------------

def _round_up(n, m):
    return (n + m - 1) // m * m


def _choose_tiles(R, S, itemsize,
                  target_block_bytes=2 * 1024 * 1024,
                  max_lane_tile=2048,
                  max_row_tile=512):
    """Pick (row_tile, lane_tile): lane_tile a multiple of 128, row_tile a
    multiple of 8, block size ~target_block_bytes (capped)."""
    ts = min(_round_up(S, 128), max_lane_tile)
    tr = target_block_bytes // (ts * itemsize)
    tr = max(8, (tr // 8) * 8)
    tr = min(tr, max_row_tile, _round_up(R, 8))
    return tr, ts


# ---------------------------------------------------------------------------
# pass 1: per-row (per (batch, channel)) min / max reduction
# ---------------------------------------------------------------------------

def _minmax_kernel(x_ref, vmin_ref, vmax_ref):
    x = x_ref[...].astype(jnp.float32)                    # (TR, TS)
    bmin = jnp.min(x, axis=-1, keepdims=True)             # (TR, 1)
    bmax = jnp.max(x, axis=-1, keepdims=True)             # (TR, 1)

    @pl.when(pl.program_id(1) == 0)
    def _():
        vmin_ref[...] = bmin
        vmax_ref[...] = bmax

    @pl.when(pl.program_id(1) > 0)
    def _():
        vmin_ref[...] = jnp.minimum(vmin_ref[...], bmin)
        vmax_ref[...] = jnp.maximum(vmax_ref[...], bmax)


def _minmax_pallas(x2, tr, ts):
    Rp, Sp = x2.shape
    return pl.pallas_call(
        _minmax_kernel,
        out_shape=(jax.ShapeDtypeStruct((Rp, 1), jnp.float32),
                   jax.ShapeDtypeStruct((Rp, 1), jnp.float32)),
        grid_spec=pltpu.PrefetchScalarGridSpec(
            num_scalar_prefetch=0,
            grid=(Rp // tr, Sp // ts),
            in_specs=[pl.BlockSpec((tr, ts), lambda i, k: (i, k))],
            out_specs=[pl.BlockSpec((tr, 1), lambda i, k: (i, 0)),
                       pl.BlockSpec((tr, 1), lambda i, k: (i, 0))],
        ),
        compiler_params=pltpu.CompilerParams(
            dimension_semantics=("parallel", "arbitrary"),
            vmem_limit_bytes=32 * 1024 * 1024),
    )(x2)


# ---------------------------------------------------------------------------
# pass 2: elementwise gamma correction
#   y = vmin + rng * exp(f * (log(max(x - vmin, 0)) - log(rng)))
# ---------------------------------------------------------------------------

def _gamma_kernel(f_ref, vmin_ref, vmax_ref, x_ref, o_ref):
    a = vmin_ref[...]                                  # (TR, 1) f32
    r = vmax_ref[...] - a                              # (TR, 1) f32, >= 0
    f = f_ref[...]                                     # (TR, 1) f32, > 0
    # guard constant rows (rng == 0): log_r -> 0, and t == 0 forces y == vmin
    log_r = jnp.where(r > 0.0, jnp.log(r), 0.0)        # (TR, 1)

    x = x_ref[...].astype(jnp.float32)                 # (TR, TS)
    t = jnp.maximum(x - a, 0.0)                        # clamp fp-negative bases
    # t == 0  ->  log(t) = -inf  ->  exp(-inf) = 0  ->  y = vmin  (== 0**f, f>0)
    y = a + r * jnp.exp(f * (jnp.log(t) - log_r))
    o_ref[...] = y.astype(o_ref.dtype)


def _gamma_pallas(x2, factor_col, vmin_col, vmax_col, tr, ts):
    Rp, Sp = x2.shape
    return pl.pallas_call(
        _gamma_kernel,
        out_shape=jax.ShapeDtypeStruct((Rp, Sp), x2.dtype),
        grid_spec=pltpu.PrefetchScalarGridSpec(
            num_scalar_prefetch=0,
            grid=(Rp // tr, Sp // ts),
            in_specs=[
                pl.BlockSpec((tr, 1), lambda i, j: (i, 0)),    # factor
                pl.BlockSpec((tr, 1), lambda i, j: (i, 0)),    # vmin
                pl.BlockSpec((tr, 1), lambda i, j: (i, 0)),    # vmax
                pl.BlockSpec((tr, ts), lambda i, j: (i, j)),   # x
            ],
            out_specs=pl.BlockSpec((tr, ts), lambda i, j: (i, j)),
        ),
        compiler_params=pltpu.CompilerParams(
            dimension_semantics=("parallel", "parallel"),
            vmem_limit_bytes=32 * 1024 * 1024),
    )(factor_col, vmin_col, vmax_col, x2)


# ---------------------------------------------------------------------------
# module forward
# ---------------------------------------------------------------------------

def _sample_lognormal_factor(key, batch, channels, factor_exp=1.0, factor_scale=1.0):
    """factor = factor_exp * exp(factor_scale * N(0, 1)), shape (B, C)."""
    f_exp = jnp.broadcast_to(jnp.asarray(factor_exp, jnp.float32), (channels,))
    f_scale = jnp.broadcast_to(jnp.asarray(factor_scale, jnp.float32), (channels,))
    z = jax.random.normal(key, (batch, channels), dtype=jnp.float32)
    return f_exp[None, :] * jnp.exp(f_scale[None, :] * z)


def gamma_correction_apply(x, factor):
    """Deterministic part of the forward: per-(b, c) min/max normalize,
    x ** factor, rescale.  x: (B, C, *spatial), factor: (B, C) positive."""
    B, C = x.shape[0], x.shape[1]
    R = B * C
    S = 1
    for d in x.shape[2:]:
        S *= d

    x2 = x.reshape(R, S)                               # native dtype, no upcast
    tr, ts = _choose_tiles(R, S, x.dtype.itemsize)
    R_pad = _round_up(R, tr)
    S_pad = _round_up(S, ts)
    if (R_pad, S_pad) != (R, S):
        # edge-replicate so padded rows/columns never perturb the min/max
        x2 = jnp.pad(x2, ((0, R_pad - R), (0, S_pad - S)), mode="edge")

    vmin, vmax = _minmax_pallas(x2, tr, ts)            # (R_pad, 1) f32 each

    f = factor.reshape(R).astype(jnp.float32)
    if R_pad != R:
        f = jnp.pad(f, (0, R_pad - R), constant_values=1.0)
    f = f.reshape(R_pad, 1)

    y2 = _gamma_pallas(x2, f, vmin, vmax, tr, ts)      # (R_pad, S_pad), x.dtype
    return y2[:R, :S].reshape(x.shape)


def random_gamma_correction(x, key, factor_exp=1.0, factor_scale=1.0):
    """Forward pass of RandomGammaCorrection (factor='lognormal',
    vmin=None, vmax=None — the module defaults)."""
    factor = _sample_lognormal_factor(key, x.shape[0], x.shape[1],
                                      factor_exp, factor_scale)
    return gamma_correction_apply(x, factor)


# ---------------------------------------------------------------------------
# smoke test
# ---------------------------------------------------------------------------

if __name__ == "__main__":
    key = jax.random.PRNGKey(0)
    kx, kf = jax.random.split(key)

    B, C, H, W = 2, 4, 16, 16
    x = jax.random.uniform(kx, (B, C, H, W), dtype=jnp.float32,
                           minval=-1.0, maxval=3.0)

    y = random_gamma_correction(x, kf, factor_exp=1.0, factor_scale=1.0)
    y = jax.block_until_ready(y)
    assert y.shape == x.shape and y.dtype == x.dtype

    # Pure-JAX reference with the same sampled factors (same key -> same draw).
    factor = _sample_lognormal_factor(kf, B, C, 1.0, 1.0).reshape(B, C, 1, 1)
    vmin = x.min(axis=(2, 3), keepdims=True)
    vmax = x.max(axis=(2, 3), keepdims=True)
    rng = vmax - vmin
    ref = ((x - vmin) / rng) ** factor * rng + vmin
    assert jnp.allclose(y, ref, atol=1e-3, rtol=1e-3), "mismatch vs reference"

    print("KERNEL_OK")
</pallas_src>

<mosaic_0001>
module attributes {stable_mosaic.version = 11 : i64} {
  func.func @_minmax_kernel(%arg0: i32, %arg1: i32, %arg2: memref<8x256xf32, #tpu.memory_space<vmem>>, %arg3: memref<8x1xf32, #tpu.memory_space<vmem>>, %arg4: memref<8x1xf32, #tpu.memory_space<vmem>>) attributes {dimension_semantics = [#tpu.dimension_semantics<parallel>, #tpu.dimension_semantics<arbitrary>], iteration_bounds = array<i64: 1, 1>, scalar_prefetch = 0 : i64, scratch_operands = 0 : i64, tpu.core_type = #tpu.core_type<tc>, window_params = [{transform_indices = @transform_0, window_bounds = array<i64: 8, 256>}, {transform_indices = @transform_1, window_bounds = array<i64: 8, 1>}, {transform_indices = @transform_2, window_bounds = array<i64: 8, 1>}]} {
    %c0 = arith.constant 0 : index
    %c0_0 = arith.constant 0 : index
    %0 = vector.load %arg2[%c0, %c0_0] : memref<8x256xf32, #tpu.memory_space<vmem>>, vector<8x256xf32>
    %cst = arith.constant dense<0x7F800000> : vector<8xf32>
    %1 = vector.multi_reduction <minimumf>, %0, %cst [1] : vector<8x256xf32> to vector<8xf32>
    %2 = vector.shape_cast %1 : vector<8xf32> to vector<8x1xf32>
    %cst_1 = arith.constant dense<0xFF800000> : vector<8xf32>
    %3 = vector.multi_reduction <maximumf>, %0, %cst_1 [1] : vector<8x256xf32> to vector<8xf32>
    %4 = vector.shape_cast %3 : vector<8xf32> to vector<8x1xf32>
    %c0_i32 = arith.constant 0 : i32
    %5 = arith.cmpi eq, %arg1, %c0_i32 : i32
    %6 = arith.extui %5 : i1 to i32
    %c0_i32_2 = arith.constant 0 : i32
    %7 = arith.cmpi ne, %6, %c0_i32_2 : i32
    scf.if %7 {
      %c0_5 = arith.constant 0 : index
      %c0_6 = arith.constant 0 : index
      %11 = vector.load %arg3[%c0_5, %c0_6] : memref<8x1xf32, #tpu.memory_space<vmem>>, vector<8x1xf32>
      tpu.vector_store %arg3[%c0_5, %c0_6], %2 {strides = array<i32>} : memref<8x1xf32, #tpu.memory_space<vmem>>, vector<8x1xf32>,
      %c0_7 = arith.constant 0 : index
      %c0_8 = arith.constant 0 : index
      %12 = vector.load %arg4[%c0_7, %c0_8] : memref<8x1xf32, #tpu.memory_space<vmem>>, vector<8x1xf32>
      tpu.vector_store %arg4[%c0_7, %c0_8], %4 {strides = array<i32>} : memref<8x1xf32, #tpu.memory_space<vmem>>, vector<8x1xf32>,
    } else {
    }
    %c0_i32_3 = arith.constant 0 : i32
    %8 = arith.cmpi sgt, %arg1, %c0_i32_3 : i32
    %9 = arith.extui %8 : i1 to i32
    %c0_i32_4 = arith.constant 0 : i32
    %10 = arith.cmpi ne, %9, %c0_i32_4 : i32
    scf.if %10 {
      %c0_5 = arith.constant 0 : index
      %c0_6 = arith.constant 0 : index
      %11 = vector.load %arg3[%c0_5, %c0_6] : memref<8x1xf32, #tpu.memory_space<vmem>>, vector<8x1xf32>
      %12 = arith.minimumf %11, %2 : vector<8x1xf32>
      %c0_7 = arith.constant 0 : index
      %c0_8 = arith.constant 0 : index
      %13 = vector.load %arg3[%c0_7, %c0_8] : memref<8x1xf32, #tpu.memory_space<vmem>>, vector<8x1xf32>
      tpu.vector_store %arg3[%c0_7, %c0_8], %12 {strides = array<i32>} : memref<8x1xf32, #tpu.memory_space<vmem>>, vector<8x1xf32>,
      %c0_9 = arith.constant 0 : index
      %c0_10 = arith.constant 0 : index
      %14 = vector.load %arg4[%c0_9, %c0_10] : memref<8x1xf32, #tpu.memory_space<vmem>>, vector<8x1xf32>
      %15 = arith.maximumf %14, %4 : vector<8x1xf32>
      %c0_11 = arith.constant 0 : index
      %c0_12 = arith.constant 0 : index
      %16 = vector.load %arg4[%c0_11, %c0_12] : memref<8x1xf32, #tpu.memory_space<vmem>>, vector<8x1xf32>
      tpu.vector_store %arg4[%c0_11, %c0_12], %15 {strides = array<i32>} : memref<8x1xf32, #tpu.memory_space<vmem>>, vector<8x1xf32>,
    } else {
    }
    return
  }
  func.func @transform_0(%arg0: i32, %arg1: i32) -> (i32, i32) {
    %c0_i32 = arith.constant 0 : i32
    return %arg0, %arg1 : i32, i32
  }
  func.func @transform_1(%arg0: i32, %arg1: i32) -> (i32, i32) {
    %c0_i32 = arith.constant 0 : i32
    %c0_i32_0 = arith.constant 0 : i32
    return %arg0, %c0_i32 : i32, i32
  }
  func.func @transform_2(%arg0: i32, %arg1: i32) -> (i32, i32) {
    %c0_i32 = arith.constant 0 : i32
    %c0_i32_0 = arith.constant 0 : i32
    return %arg0, %c0_i32 : i32, i32
  }
}

</mosaic_0001>

<llo_original>
// kernel: tpu_custom_call.1
$region0: #{tpu_custom_call.1}
  #allocation0 [shape = 'u32[]', space=smem, size = 0x4, offset = 0x4, fixed_abs, tag = 'smem constant byte address 0x4 - core index']
  #allocation1 [shape = 'u32[144,128]{1,0:T(1,128)}', space=vmem, size = 0x12000, scoped, tag = 'internal scratch']
  %s0 = inlined_call_operand.hbm [shape: f32[8,256], index: 0, kind: input, shape index: {}]
  %s1 = inlined_call_operand.vmem [shape: f32[8,1], index: 1, kind: output, shape index: {0}]
  %s2 = inlined_call_operand.vmem [shape: f32[8,1], index: 2, kind: output, shape index: {1}]
  %3 = xla_tuple %s1, %s2
  %s4 = sld [smem:[#allocation0]]
  $region34: #{tpu_custom_call.1} parent=0
    _
  %s6 = ssub.s32 1, %s4
  %s7 = scalar_select 0, %s6, %s4
  $region1: #{tpu_custom_call.1} parent=0
    #allocation2 [shape = 'u8[8192]{0}', space=vmem, size = 0x2000, scoped, tag = 'input window, operand 0, single buffered']
    #allocation3 [shape = 's32[1]{0}', space=sflag, size = 0x4, scoped, tag = 'scoped memory for tpu_custom_call.1']
    %8 = vsyncpa [#allocation3], 0
    // Predicated region
    $region2: #{tpu_custom_call.1} parent=1 // pred_check
      _
    $region3: #{tpu_custom_call.1} parent=1 // pred_check_branch
      %10 = sbr.rel (0) target = $region5
    $region4: #{tpu_custom_call.1} parent=1 // pred_region
      %s12 = ssub.s32 256, 256
      %13 = vsyncadd [#allocation3], %s12
      %s15 = sshll.u32 [#allocation2], 4
      %s16 = int_to_ptr.vmem [resolvable:$true] %s15
      %18 = dma.hbm_to_vmem [thread:$0]  %s0, 256, %s16, [#allocation3]
    $region5: #{tpu_custom_call.1} parent=1 // pred_fallthru
      _
    // Predicated region
    $region6: #{tpu_custom_call.1} parent=1 // pred_check
      _
    $region7: #{tpu_custom_call.1} parent=1 // pred_check_branch
      %20 = sbr.rel (0) target = $region9
    $region8: #{tpu_custom_call.1} parent=1 // pred_region
      %21 = dma.done [#allocation3], 256
    $region9: #{tpu_custom_call.1} parent=1 // pred_fallthru
      _
    %v22 = vld [vmem:[#allocation2] sm:$0xff]
    %v23 = vld [vmem:[#allocation2 + $0x8] sm:$0xff]
    %v24 = vmin.f32 %v22, %v23
    %25 = vmin.xlane.f32.xlu0 %v24
    %v26 = vpop.xlane.xlu0 %25
    %v27 = vmax.f32 %v22, %v23
    %28 = vmax.xlane.f32.xlu0 %v27
    %v29 = vpop.xlane.xlu0 %28
    %p30 = scmp.eq.s32.totalorder 0, 0
    // Predicated region
    $region10: #{tpu_custom_call.1} parent=1 // pred_check
      %p31 = pneg %p30
    $region11: #{tpu_custom_call.1} parent=1 // pred_check_branch
      %33 = sbr.rel (%p31) target = $region13
    $region12: #{tpu_custom_call.1} parent=1 // pred_region
      %vm34 = vcmask 7168
      %35 = vst.msk [vmem:[%s1] sm:$0xff] %vm34, %v26
      %36 = vst.msk [vmem:[%s2] sm:$0xff] %vm34, %v29
    $region13: #{tpu_custom_call.1} parent=1 // pred_fallthru
      _
    %p37 = scmp.gt.s32.totalorder 0, 0
    // Predicated region
    $region14: #{tpu_custom_call.1} parent=1 // pred_check
      %p38 = pneg %p37
    $region15: #{tpu_custom_call.1} parent=1 // pred_check_branch
      %40 = sbr.rel (%p38) target = $region17
    $region16: #{tpu_custom_call.1} parent=1 // pred_region
      %v41 = vld [vmem:[%s1] sm:$0xff]
      %v42 = vmin.f32 %v41, %v26
      %vm43 = vcmask 7168
      %44 = vst.msk [vmem:[%s1] sm:$0xff] %vm43, %v42
      %v45 = vld [vmem:[%s2] sm:$0xff]
      %v46 = vmax.f32 %v45, %v29
      %47 = vst.msk [vmem:[%s2] sm:$0xff] %vm43, %v46
    $region17: #{tpu_custom_call.1} parent=1 // pred_fallthru
      _
    // Predicated region
    $region18: #{tpu_custom_call.1} parent=1 // pred_check
      _
    $region19: #{tpu_custom_call.1} parent=1 // pred_check_branch
      %49 = sbr.rel (0) target = $region21
    $region20: #{tpu_custom_call.1} parent=1 // pred_region
      _
    $region21: #{tpu_custom_call.1} parent=1 // pred_fallthru
      _
    // Predicated region
    $region22: #{tpu_custom_call.1} parent=1 // pred_check
      _
    $region23: #{tpu_custom_call.1} parent=1 // pred_check_branch
      %51 = sbr.rel (0) target = $region25
    $region24: #{tpu_custom_call.1} parent=1 // pred_region
      _
    $region25: #{tpu_custom_call.1} parent=1 // pred_fallthru
      _
    // Predicated region
    $region26: #{tpu_custom_call.1} parent=1 // pred_check
      _
    $region27: #{tpu_custom_call.1} parent=1 // pred_check_branch
      %53 = sbr.rel (0) target = $region29
    $region28: #{tpu_custom_call.1} parent=1 // pred_region
      _
    $region29: #{tpu_custom_call.1} parent=1 // pred_fallthru
      _
    // Predicated region
    $region30: #{tpu_custom_call.1} parent=1 // pred_check
      _
    $region31: #{tpu_custom_call.1} parent=1 // pred_check_branch
      %55 = sbr.rel (0) target = $region33
    $region32: #{tpu_custom_call.1} parent=1 // pred_region
      _
    $region33: #{tpu_custom_call.1} parent=1 // pred_fallthru
      _
    %56 = vsyncpa [#allocation3], 1

</llo_original>
